<compile_context>
chip_gen: v5e
topology: v5e:2x2
jax: 0.10.0
libtpu: 0.0.40
codegen_flags: <defaults>
</compile_context>

<pallas_src>
from collections.abc import Iterable
from typing import Tuple, Union

import jax
import jax.numpy as jnp
from jax import lax
from jax.experimental import pallas as pl
from jax.experimental.pallas import tpu as pltpu

_LANE = 128


# ----------------------------- helpers (glue) ------------------------------

def _round_up(x: int, m: int) -> int:
    return ((x + m - 1) // m) * m


def to_ntuple(val: Union[int, Iterable], n: int) -> Tuple[int, ...]:
    if isinstance(val, Iterable):
        out = tuple(val)
        if len(out) == n:
            return out
        raise ValueError(f"Cannot cast tuple of length {len(out)} to length {n}.")
    return n * (val,)


def pad_calculate(padding, kernel_size, signal_size, stride):
    # Mirrors `pad_caculate` in the reference (only 'valid' / 'same' supported).
    if padding == "valid":
        return (0, 0)
    if padding == "same":
        h1, w1 = kernel_size[2], kernel_size[3]
        h2, w2 = signal_size[2], signal_size[3]
        pad_h = int(((h2 - 1) / stride - h2 + h1) / 2)
        pad_w = int(((w2 - 1) / stride - w2 + w1) / 2)
        return (pad_h, pad_w)
    raise ValueError(f"Unsupported padding: {padding!r}")


_PAD_MODE = {"constant": "constant", "reflect": "reflect",
             "replicate": "edge", "circular": "wrap"}


def _vmem_capacity_bytes() -> int:
    """Physical VMEM of this generation (conservative fallback = v7x 64 MiB)."""
    try:
        info = pltpu.get_tpu_info()
        cap = getattr(info, "vmem_capacity_bytes", None)
        if cap:
            return int(cap)
    except Exception:
        pass
    return 64 << 20


# --------------------------- Pallas kernel ----------------------------------

def _make_cmul_kernel(bt: int, cin_g: int, cout_g: int, tf: int, strip: int):
    """Per-(group, f-tile, batch-block) complex channel contraction.

    s_re_ref / s_im_ref : (bt, cin_g, tf)         Re/Im of signal
    k_re_ref / k_im_ref : (cin_g, cout_g, tf)     Re/Im of (conjugated) weight
    o_re_ref / o_im_ref : (bt, cout_g, tf)        Re/Im of output
    The lane axis is processed in `strip`-wide chunks so the two f32
    accumulators (2 * cout_g * strip * 4 B) stay well inside the vreg file.
    """
    n_strips = tf // strip
    unrolled = cin_g <= 32   # full static unroll only for small channel counts

    def kernel(s_re_ref, s_im_ref, k_re_ref, k_im_ref, o_re_ref, o_im_ref):
        for b in range(bt):                       # static: bt is tiny (<= 8)
            for st in range(n_strips):            # static: lane-strip loop
                lo = st * strip
                hi = lo + strip
                if unrolled:
                    acc_re = jnp.zeros((cout_g, strip), jnp.float32)
                    acc_im = jnp.zeros((cout_g, strip), jnp.float32)
                    for c in range(cin_g):
                        a_re = s_re_ref[b, c:c + 1, lo:hi]      # (1, strip)
                        a_im = s_im_ref[b, c:c + 1, lo:hi]      # (1, strip)
                        b_re = k_re_ref[c, :, lo:hi]            # (cout_g, strip)
                        b_im = k_im_ref[c, :, lo:hi]            # (cout_g, strip)
                        # plain complex product, accumulated directly:
                        # 4 muls + 4 adds per cin step (fewer VALU ops than the
                        # Gauss 3-mult form on a no-FMA VPU).
                        acc_re = acc_re + a_re * b_re
                        acc_re = acc_re - a_im * b_im
                        acc_im = acc_im + a_re * b_im
                        acc_im = acc_im + a_im * b_re
                else:
                    # Large cin_g: partially-unrolled fori_loop keeps program
                    # size / compile time / live ranges bounded.
                    def body(c, carry):
                        acc_re, acc_im = carry
                        a_re = s_re_ref[b, pl.ds(c, 1), pl.ds(lo, strip)]
                        a_im = s_im_ref[b, pl.ds(c, 1), pl.ds(lo, strip)]
                        b_re = k_re_ref[pl.ds(c, 1), :, pl.ds(lo, strip)][0]
                        b_im = k_im_ref[pl.ds(c, 1), :, pl.ds(lo, strip)][0]
                        acc_re = acc_re + a_re * b_re
                        acc_re = acc_re - a_im * b_im
                        acc_im = acc_im + a_re * b_im
                        acc_im = acc_im + a_im * b_re
                        return acc_re, acc_im

                    acc_re, acc_im = lax.fori_loop(
                        0, cin_g, body,
                        (jnp.zeros((cout_g, strip), jnp.float32),
                         jnp.zeros((cout_g, strip), jnp.float32)),
                        unroll=4)
                o_re_ref[b, :, lo:hi] = acc_re
                o_im_ref[b, :, lo:hi] = acc_im

    return kernel


def complex_matmul_pallas(signal_fr, kernel_fr, groups: int):
    """Frequency-domain grouped channel contraction (the `complex_matmul` of the ref).

    signal_fr: (B, Cin, Hf, Wf)            complex64
    kernel_fr: (Cout, Cin//groups, Hf, Wf) complex64 (already conjugated)
    returns:   (B, Cout, Hf, Wf)           complex64
    """
    B, Cin, Hf, Wf = signal_fr.shape
    Cout = kernel_fr.shape[0]
    cin_g = Cin // groups
    cout_g = Cout // groups
    F = Hf * Wf

    # ---- generation-aware VMEM budgets -------------------------------------
    vmem_cap = _vmem_capacity_bytes()
    if vmem_cap >= (96 << 20):          # v5e / v6e: 128 MiB physical VMEM
        w_cap = 8 << 20                 # per-block weight footprint cap
        vmem_ceiling = 96 << 20
    else:                               # v7x: 64 MiB per TensorCore
        w_cap = 3 << 20
        vmem_ceiling = 48 << 20         # leave headroom for buffers/scratch

    # ---- frequency tiling: flatten (Hf, Wf) onto lanes ----------------------
    # TF chosen directly from VMEM budgets (no divisor search that could
    # collapse to 128-wide tiles); the frequency axis is padded up to a
    # multiple of TF.
    f128 = _round_up(F, _LANE)
    per_lane_w = 2 * cin_g * cout_g * 4
    per_lane_tot = (2 * cin_g + 2 * cin_g * cout_g + 2 * cout_g) * 4
    tf_lanes = min(w_cap // per_lane_w, (vmem_ceiling // 6) // per_lane_tot)
    TF = max(_LANE, (min(tf_lanes, 8192) // _LANE) * _LANE)
    TF = min(TF, f128)
    Fp = _round_up(F, TF)
    n_ft = Fp // TF

    # ---- lane strip: keep the two f32 accumulators under ~64 KiB of vregs ---
    strip = _LANE
    units = TF // _LANE
    for d in range(1, units + 1):
        if units % d == 0 and cout_g * d * _LANE <= 8192:
            strip = d * _LANE

    # ---- fold batch elements into one grid step (amortize step overhead) ----
    Bt = 1
    for d in range(1, min(B, 8) + 1):
        if B % d == 0:
            blk = (2 * d * cin_g + 2 * cin_g * cout_g + 2 * d * cout_g) * TF * 4
            if 2 * blk <= vmem_ceiling // 3:
                Bt = d
    n_bt = B // Bt

    # ---- pack separate re/im planes (no stacked concat; no post-slice) ------
    pad_f = ((0, 0), (0, 0), (0, 0), (0, Fp - F))
    s_re = jnp.pad(jnp.real(signal_fr).reshape(B, groups, cin_g, F)
                   .astype(jnp.float32), pad_f)
    s_im = jnp.pad(jnp.imag(signal_fr).reshape(B, groups, cin_g, F)
                   .astype(jnp.float32), pad_f)

    # Weights laid out (G, cin_g, cout_g, Fp): the input-channel axis leads so
    # the kernel reads contiguous (cout_g, strip) slabs with first-axis
    # indexing (no sublane gather).
    k_re = jnp.real(kernel_fr).reshape(groups, cout_g, cin_g, F)
    k_im = jnp.imag(kernel_fr).reshape(groups, cout_g, cin_g, F)
    k_re = jnp.pad(jnp.transpose(k_re, (0, 2, 1, 3)).astype(jnp.float32), pad_f)
    k_im = jnp.pad(jnp.transpose(k_im, (0, 2, 1, 3)).astype(jnp.float32), pad_f)

    block_bytes = (2 * Bt * cin_g + 2 * cin_g * cout_g + 2 * Bt * cout_g) * TF * 4
    vmem_limit = int(min(max(2 * block_bytes + (4 << 20), 16 << 20), vmem_ceiling))

    kernel = _make_cmul_kernel(Bt, cin_g, cout_g, TF, strip)

    sig_spec = pl.BlockSpec((Bt, None, cin_g, TF), lambda g, f, b: (b, g, 0, f))
    w_spec = pl.BlockSpec((None, cin_g, cout_g, TF), lambda g, f, b: (g, 0, 0, f))
    out_spec = pl.BlockSpec((Bt, None, cout_g, TF), lambda g, f, b: (b, g, 0, f))

    # Grid (groups, f_tile, batch): batch is innermost and "arbitrary" so the
    # weight block index is constant along it -> Pallas keeps the weight tile
    # resident in VMEM across the whole batch (and megacore sharding cannot
    # split the batch axis across TensorCores); groups x f-tiles carry the
    # "parallel" semantics.
    out_re, out_im = pl.pallas_call(
        kernel,
        out_shape=(jax.ShapeDtypeStruct((B, groups, cout_g, Fp), jnp.float32),
                   jax.ShapeDtypeStruct((B, groups, cout_g, Fp), jnp.float32)),
        grid=(groups, n_ft, n_bt),
        in_specs=[sig_spec, sig_spec, w_spec, w_spec],
        out_specs=(out_spec, out_spec),
        compiler_params=pltpu.CompilerParams(
            dimension_semantics=("parallel", "parallel", "arbitrary"),
            vmem_limit_bytes=vmem_limit),
    )(s_re, s_im, k_re, k_im)

    o_re = out_re[..., :F].reshape(B, Cout, Hf, Wf)
    o_im = out_im[..., :F].reshape(B, Cout, Hf, Wf)
    return lax.complex(o_re, o_im)


# ----------------------------- fft_conv -------------------------------------

def fft_conv_pallas(signal, kernel, bias=None, padding="same",
                    padding_mode="constant", stride=1, dilation=1, groups=1):
    """JAX/Pallas port of the reference `fft_conv` (2-D NCHW)."""
    assert signal.ndim == 4 and kernel.ndim == 4, "2-D (NCHW) only"
    n = signal.ndim - 2
    stride_ = to_ntuple(stride, n)
    dilation_ = to_ntuple(dilation, n)
    assert all(d == 1 for d in dilation_), "dilation != 1 not supported"
    # TODO(synk): dilation != 1 is not implemented (the dilation offset/cutoff
    # tensors in the reference are dead code anyway).

    pad_h, pad_w = pad_calculate(padding, kernel.shape, signal.shape, stride_[0])

    # pad signal, then make last spatial dim even for rfft (zeros, like F.pad)
    sig = jnp.pad(signal, ((0, 0), (0, 0), (pad_h, pad_h), (pad_w, pad_w)),
                  mode=_PAD_MODE[padding_mode])
    if sig.shape[-1] % 2 != 0:
        sig_ = jnp.pad(sig, ((0, 0), (0, 0), (0, 0), (0, 1)))
    else:
        sig_ = sig

    B, Cin, Hs, Ws = sig_.shape
    Cout, cin_g, kh, kw = kernel.shape

    # zero-pad kernel to the signal spatial size (kernel at the origin)
    padded_kernel = jnp.pad(kernel, ((0, 0), (0, 0), (0, Hs - kh), (0, Ws - kw)))

    # FFTs stay in plain JAX (no Pallas FFT primitive).
    signal_fr = jnp.fft.rfftn(sig_, axes=(2, 3))                     # (B,Cin,Hf,Wf) c64
    kernel_fr = jnp.conj(jnp.fft.rfftn(padded_kernel, axes=(2, 3)))  # imag *= -1

    # --- hot path: per-frequency grouped complex channel contraction (Pallas) ---
    output_fr = complex_matmul_pallas(signal_fr, kernel_fr, groups)

    output = jnp.fft.irfftn(output_fr, s=(Hs, Ws), axes=(2, 3))

    # crop to the valid cross-correlation window of the (padded) signal, strided
    Hsig, Wsig = sig.shape[2], sig.shape[3]
    output = output[:, :, 0:Hsig - kh + 1:stride_[0],
                    0:Wsig - kw + 1:stride_[1]].astype(jnp.float32)

    if bias is not None:
        # Bias stays in plain JAX so XLA fuses it into the irfft epilogue; a
        # standalone Pallas kernel here would be lane-sparse (W << 128 lanes)
        # and cost an extra full HBM round trip of the output.
        output = output + bias.astype(jnp.float32)[None, :, None, None]
    return output


# pure-jnp reference (same FFT math, complex einsum instead of Pallas)
def fft_conv_reference(signal, kernel, bias=None, padding="same", stride=1, groups=1):
    pad_h, pad_w = pad_calculate(padding, kernel.shape, signal.shape, stride)
    sig = jnp.pad(signal, ((0, 0), (0, 0), (pad_h, pad_h), (pad_w, pad_w)))
    sig_ = jnp.pad(sig, ((0, 0), (0, 0), (0, 0), (0, 1))) if sig.shape[-1] % 2 else sig
    B, Cin, Hs, Ws = sig_.shape
    Cout, cin_g, kh, kw = kernel.shape
    pk = jnp.pad(kernel, ((0, 0), (0, 0), (0, Hs - kh), (0, Ws - kw)))
    sf = jnp.fft.rfftn(sig_, axes=(2, 3))
    kf = jnp.conj(jnp.fft.rfftn(pk, axes=(2, 3)))
    Hf, Wf = sf.shape[2], sf.shape[3]
    sfg = sf.reshape(B, groups, cin_g, Hf, Wf)
    kfg = kf.reshape(groups, Cout // groups, cin_g, Hf, Wf)
    of = jnp.einsum("bgihw,goihw->bgohw", sfg, kfg).reshape(B, Cout, Hf, Wf)
    out = jnp.fft.irfftn(of, s=(Hs, Ws), axes=(2, 3))
    out = out[:, :, 0:sig.shape[2] - kh + 1:stride, 0:sig.shape[3] - kw + 1:stride]
    if bias is not None:
        out = out + bias[None, :, None, None]
    return out.astype(jnp.float32)


# ------------------------------- module -------------------------------------

class FFTConv2dPallas:
    """Mirror of `_FFTConv` (ndim=2) with deterministic in-script init."""

    def __init__(self, in_channels, out_channels, kernel_size, padding="same",
                 padding_mode="constant", stride=1, dilation=1, groups=1,
                 bias=True, ndim=2, key=None):
        if in_channels % groups or out_channels % groups:
            raise ValueError("channels must be divisible by groups")
        ks = to_ntuple(kernel_size, ndim)
        key = jax.random.PRNGKey(0) if key is None else key
        kw_, kb_ = jax.random.split(key)
        self.weight = jax.random.normal(
            kw_, (out_channels, in_channels // groups, *ks), jnp.float32)
        self.bias = jax.random.normal(kb_, (out_channels,), jnp.float32) if bias else None
        self.padding = padding
        self.padding_mode = padding_mode
        self.stride = stride
        self.dilation = dilation
        self.groups = groups

    def __call__(self, x):
        return fft_conv_pallas(x, self.weight, bias=self.bias,
                               padding=self.padding, padding_mode=self.padding_mode,
                               stride=self.stride, dilation=self.dilation,
                               groups=self.groups)


# -------------------------------- main ---------------------------------------

if __name__ == "__main__":
    key = jax.random.PRNGKey(0)
    k_x, k_m1, k_m2 = jax.random.split(key, 3)

    B, Cin, H, W = 2, 4, 16, 16
    Cout, ksize = 8, 3

    x = jax.random.normal(k_x, (B, Cin, H, W), jnp.float32)

    # groups = 1
    conv = FFTConv2dPallas(Cin, Cout, ksize, padding="same", bias=True,
                           ndim=2, key=k_m1)
    out = jax.block_until_ready(conv(x))
    assert out.shape == (B, Cout, H, W), out.shape
    ref = fft_conv_reference(x, conv.weight, conv.bias, padding="same",
                             stride=1, groups=1)
    assert jnp.allclose(out, ref, atol=1e-3, rtol=1e-3), \
        float(jnp.max(jnp.abs(out - ref)))

    # groups = 2 (exercises the grouped contraction path)
    conv_g = FFTConv2dPallas(Cin, Cout, ksize, padding="same", bias=True,
                             ndim=2, groups=2, key=k_m2)
    out_g = jax.block_until_ready(conv_g(x))
    assert out_g.shape == (B, Cout, H, W), out_g.shape
    ref_g = fft_conv_reference(x, conv_g.weight, conv_g.bias, padding="same",
                               stride=1, groups=2)
    assert jnp.allclose(out_g, ref_g, atol=1e-3, rtol=1e-3), \
        float(jnp.max(jnp.abs(out_g - ref_g)))

    print("KERNEL_OK")
</pallas_src>

<mosaic_0001>
module attributes {stable_mosaic.version = 11 : i64} {
  func.func @kernel(%arg0: i32, %arg1: i32, %arg2: i32, %arg3: memref<2x1x4x256xf32, #tpu.memory_space<vmem>>, %arg4: memref<2x1x4x256xf32, #tpu.memory_space<vmem>>, %arg5: memref<1x4x8x256xf32, #tpu.memory_space<vmem>>, %arg6: memref<1x4x8x256xf32, #tpu.memory_space<vmem>>, %arg7: memref<2x1x8x256xf32, #tpu.memory_space<vmem>>, %arg8: memref<2x1x8x256xf32, #tpu.memory_space<vmem>>) attributes {dimension_semantics = [#tpu.dimension_semantics<parallel>, #tpu.dimension_semantics<parallel>, #tpu.dimension_semantics<arbitrary>], iteration_bounds = array<i64: 1, 1, 1>, scalar_prefetch = 0 : i64, scratch_operands = 0 : i64, tpu.core_type = #tpu.core_type<tc>, window_params = [{transform_indices = @transform_0, window_bounds = array<i64: 2, 1, 4, 256>}, {transform_indices = @transform_1, window_bounds = array<i64: 2, 1, 4, 256>}, {transform_indices = @transform_2, window_bounds = array<i64: 1, 4, 8, 256>}, {transform_indices = @transform_3, window_bounds = array<i64: 1, 4, 8, 256>}, {transform_indices = @transform_4, window_bounds = array<i64: 2, 1, 8, 256>}, {transform_indices = @transform_5, window_bounds = array<i64: 2, 1, 8, 256>}]} {
    %cst = arith.constant 0.000000e+00 : f32
    %0 = vector.broadcast %cst : f32 to vector<8x256xf32>
    %cst_0 = arith.constant 0.000000e+00 : f32
    %1 = vector.broadcast %cst_0 : f32 to vector<8x256xf32>
    %c0 = arith.constant 0 : index
    %c0_1 = arith.constant 0 : index
    %c0_2 = arith.constant 0 : index
    %c0_3 = arith.constant 0 : index
    %2 = vector.load %arg3[%c0, %c0_1, %c0_2, %c0_3] : memref<2x1x4x256xf32, #tpu.memory_space<vmem>>, vector<1x1x1x256xf32>
    %3 = vector.shape_cast %2 : vector<1x1x1x256xf32> to vector<1x256xf32>
    %c0_4 = arith.constant 0 : index
    %c0_5 = arith.constant 0 : index
    %c0_6 = arith.constant 0 : index
    %c0_7 = arith.constant 0 : index
    %4 = vector.load %arg4[%c0_4, %c0_5, %c0_6, %c0_7] : memref<2x1x4x256xf32, #tpu.memory_space<vmem>>, vector<1x1x1x256xf32>
    %5 = vector.shape_cast %4 : vector<1x1x1x256xf32> to vector<1x256xf32>
    %c0_8 = arith.constant 0 : index
    %c0_9 = arith.constant 0 : index
    %c0_10 = arith.constant 0 : index
    %c0_11 = arith.constant 0 : index
    %6 = vector.load %arg5[%c0_8, %c0_9, %c0_10, %c0_11] : memref<1x4x8x256xf32, #tpu.memory_space<vmem>>, vector<1x1x8x256xf32>
    %7 = vector.shape_cast %6 : vector<1x1x8x256xf32> to vector<8x256xf32>
    %c0_12 = arith.constant 0 : index
    %c0_13 = arith.constant 0 : index
    %c0_14 = arith.constant 0 : index
    %c0_15 = arith.constant 0 : index
    %8 = vector.load %arg6[%c0_12, %c0_13, %c0_14, %c0_15] : memref<1x4x8x256xf32, #tpu.memory_space<vmem>>, vector<1x1x8x256xf32>
    %9 = vector.shape_cast %8 : vector<1x1x8x256xf32> to vector<8x256xf32>
    %10 = vector.broadcast %3 : vector<1x256xf32> to vector<8x256xf32>
    %11 = arith.mulf %10, %7 : vector<8x256xf32>
    %12 = arith.addf %0, %11 : vector<8x256xf32>
    %13 = vector.broadcast %5 : vector<1x256xf32> to vector<8x256xf32>
    %14 = arith.mulf %13, %9 : vector<8x256xf32>
    %15 = arith.subf %12, %14 : vector<8x256xf32>
    %16 = vector.broadcast %3 : vector<1x256xf32> to vector<8x256xf32>
    %17 = arith.mulf %16, %9 : vector<8x256xf32>
    %18 = arith.addf %1, %17 : vector<8x256xf32>
    %19 = vector.broadcast %5 : vector<1x256xf32> to vector<8x256xf32>
    %20 = arith.mulf %19, %7 : vector<8x256xf32>
    %21 = arith.addf %18, %20 : vector<8x256xf32>
    %c0_16 = arith.constant 0 : index
    %c0_17 = arith.constant 0 : index
    %c1 = arith.constant 1 : index
    %c0_18 = arith.constant 0 : index
    %22 = vector.load %arg3[%c0_16, %c0_17, %c1, %c0_18] : memref<2x1x4x256xf32, #tpu.memory_space<vmem>>, vector<1x1x1x256xf32>
    %23 = vector.shape_cast %22 : vector<1x1x1x256xf32> to vector<1x256xf32>
    %c0_19 = arith.constant 0 : index
    %c0_20 = arith.constant 0 : index
    %c1_21 = arith.constant 1 : index
    %c0_22 = arith.constant 0 : index
    %24 = vector.load %arg4[%c0_19, %c0_20, %c1_21, %c0_22] : memref<2x1x4x256xf32, #tpu.memory_space<vmem>>, vector<1x1x1x256xf32>
    %25 = vector.shape_cast %24 : vector<1x1x1x256xf32> to vector<1x256xf32>
    %c0_23 = arith.constant 0 : index
    %c1_24 = arith.constant 1 : index
    %c0_25 = arith.constant 0 : index
    %c0_26 = arith.constant 0 : index
    %26 = vector.load %arg5[%c0_23, %c1_24, %c0_25, %c0_26] : memref<1x4x8x256xf32, #tpu.memory_space<vmem>>, vector<1x1x8x256xf32>
    %27 = vector.shape_cast %26 : vector<1x1x8x256xf32> to vector<8x256xf32>
    %c0_27 = arith.constant 0 : index
    %c1_28 = arith.constant 1 : index
    %c0_29 = arith.constant 0 : index
    %c0_30 = arith.constant 0 : index
    %28 = vector.load %arg6[%c0_27, %c1_28, %c0_29, %c0_30] : memref<1x4x8x256xf32, #tpu.memory_space<vmem>>, vector<1x1x8x256xf32>
    %29 = vector.shape_cast %28 : vector<1x1x8x256xf32> to vector<8x256xf32>
    %30 = vector.broadcast %23 : vector<1x256xf32> to vector<8x256xf32>
    %31 = arith.mulf %30, %27 : vector<8x256xf32>
    %32 = arith.addf %15, %31 : vector<8x256xf32>
    %33 = vector.broadcast %25 : vector<1x256xf32> to vector<8x256xf32>
    %34 = arith.mulf %33, %29 : vector<8x256xf32>
    %35 = arith.subf %32, %34 : vector<8x256xf32>
    %36 = vector.broadcast %23 : vector<1x256xf32> to vector<8x256xf32>
    %37 = arith.mulf %36, %29 : vector<8x256xf32>
    %38 = arith.addf %21, %37 : vector<8x256xf32>
    %39 = vector.broadcast %25 : vector<1x256xf32> to vector<8x256xf32>
    %40 = arith.mulf %39, %27 : vector<8x256xf32>
    %41 = arith.addf %38, %40 : vector<8x256xf32>
    %c0_31 = arith.constant 0 : index
    %c0_32 = arith.constant 0 : index
    %c2 = arith.constant 2 : index
    %c0_33 = arith.constant 0 : index
    %42 = vector.load %arg3[%c0_31, %c0_32, %c2, %c0_33] : memref<2x1x4x256xf32, #tpu.memory_space<vmem>>, vector<1x1x1x256xf32>
    %43 = vector.shape_cast %42 : vector<1x1x1x256xf32> to vector<1x256xf32>
    %c0_34 = arith.constant 0 : index
    %c0_35 = arith.constant 0 : index
    %c2_36 = arith.constant 2 : index
    %c0_37 = arith.constant 0 : index
    %44 = vector.load %arg4[%c0_34, %c0_35, %c2_36, %c0_37] : memref<2x1x4x256xf32, #tpu.memory_space<vmem>>, vector<1x1x1x256xf32>
    %45 = vector.shape_cast %44 : vector<1x1x1x256xf32> to vector<1x256xf32>
    %c0_38 = arith.constant 0 : index
    %c2_39 = arith.constant 2 : index
    %c0_40 = arith.constant 0 : index
    %c0_41 = arith.constant 0 : index
    %46 = vector.load %arg5[%c0_38, %c2_39, %c0_40, %c0_41] : memref<1x4x8x256xf32, #tpu.memory_space<vmem>>, vector<1x1x8x256xf32>
    %47 = vector.shape_cast %46 : vector<1x1x8x256xf32> to vector<8x256xf32>
    %c0_42 = arith.constant 0 : index
    %c2_43 = arith.constant 2 : index
    %c0_44 = arith.constant 0 : index
    %c0_45 = arith.constant 0 : index
    %48 = vector.load %arg6[%c0_42, %c2_43, %c0_44, %c0_45] : memref<1x4x8x256xf32, #tpu.memory_space<vmem>>, vector<1x1x8x256xf32>
    %49 = vector.shape_cast %48 : vector<1x1x8x256xf32> to vector<8x256xf32>
    %50 = vector.broadcast %43 : vector<1x256xf32> to vector<8x256xf32>
    %51 = arith.mulf %50, %47 : vector<8x256xf32>
    %52 = arith.addf %35, %51 : vector<8x256xf32>
    %53 = vector.broadcast %45 : vector<1x256xf32> to vector<8x256xf32>
    %54 = arith.mulf %53, %49 : vector<8x256xf32>
    %55 = arith.subf %52, %54 : vector<8x256xf32>
    %56 = vector.broadcast %43 : vector<1x256xf32> to vector<8x256xf32>
    %57 = arith.mulf %56, %49 : vector<8x256xf32>
    %58 = arith.addf %41, %57 : vector<8x256xf32>
    %59 = vector.broadcast %45 : vector<1x256xf32> to vector<8x256xf32>
    %60 = arith.mulf %59, %47 : vector<8x256xf32>
    %61 = arith.addf %58, %60 : vector<8x256xf32>
    %c0_46 = arith.constant 0 : index
    %c0_47 = arith.constant 0 : index
    %c3 = arith.constant 3 : index
    %c0_48 = arith.constant 0 : index
    %62 = vector.load %arg3[%c0_46, %c0_47, %c3, %c0_48] : memref<2x1x4x256xf32, #tpu.memory_space<vmem>>, vector<1x1x1x256xf32>
    %63 = vector.shape_cast %62 : vector<1x1x1x256xf32> to vector<1x256xf32>
    %c0_49 = arith.constant 0 : index
    %c0_50 = arith.constant 0 : index
    %c3_51 = arith.constant 3 : index
    %c0_52 = arith.constant 0 : index
    %64 = vector.load %arg4[%c0_49, %c0_50, %c3_51, %c0_52] : memref<2x1x4x256xf32, #tpu.memory_space<vmem>>, vector<1x1x1x256xf32>
    %65 = vector.shape_cast %64 : vector<1x1x1x256xf32> to vector<1x256xf32>
    %c0_53 = arith.constant 0 : index
    %c3_54 = arith.constant 3 : index
    %c0_55 = arith.constant 0 : index
    %c0_56 = arith.constant 0 : index
    %66 = vector.load %arg5[%c0_53, %c3_54, %c0_55, %c0_56] : memref<1x4x8x256xf32, #tpu.memory_space<vmem>>, vector<1x1x8x256xf32>
    %67 = vector.shape_cast %66 : vector<1x1x8x256xf32> to vector<8x256xf32>
    %c0_57 = arith.constant 0 : index
    %c3_58 = arith.constant 3 : index
    %c0_59 = arith.constant 0 : index
    %c0_60 = arith.constant 0 : index
    %68 = vector.load %arg6[%c0_57, %c3_58, %c0_59, %c0_60] : memref<1x4x8x256xf32, #tpu.memory_space<vmem>>, vector<1x1x8x256xf32>
    %69 = vector.shape_cast %68 : vector<1x1x8x256xf32> to vector<8x256xf32>
    %70 = vector.broadcast %63 : vector<1x256xf32> to vector<8x256xf32>
    %71 = arith.mulf %70, %67 : vector<8x256xf32>
    %72 = arith.addf %55, %71 : vector<8x256xf32>
    %73 = vector.broadcast %65 : vector<1x256xf32> to vector<8x256xf32>
    %74 = arith.mulf %73, %69 : vector<8x256xf32>
    %75 = arith.subf %72, %74 : vector<8x256xf32>
    %76 = vector.broadcast %63 : vector<1x256xf32> to vector<8x256xf32>
    %77 = arith.mulf %76, %69 : vector<8x256xf32>
    %78 = arith.addf %61, %77 : vector<8x256xf32>
    %79 = vector.broadcast %65 : vector<1x256xf32> to vector<8x256xf32>
    %80 = arith.mulf %79, %67 : vector<8x256xf32>
    %81 = arith.addf %78, %80 : vector<8x256xf32>
    %c0_61 = arith.constant 0 : index
    %c0_62 = arith.constant 0 : index
    %c0_63 = arith.constant 0 : index
    %c0_64 = arith.constant 0 : index
    %82 = vector.load %arg7[%c0_61, %c0_62, %c0_63, %c0_64] : memref<2x1x8x256xf32, #tpu.memory_space<vmem>>, vector<1x1x8x256xf32>
    %83 = vector.shape_cast %82 : vector<1x1x8x256xf32> to vector<8x256xf32>
    %84 = vector.shape_cast %75 : vector<8x256xf32> to vector<1x1x8x256xf32>
    tpu.vector_store %arg7[%c0_61, %c0_62, %c0_63, %c0_64], %84 {strides = array<i32>} : memref<2x1x8x256xf32, #tpu.memory_space<vmem>>, vector<1x1x8x256xf32>,
    %c0_65 = arith.constant 0 : index
    %c0_66 = arith.constant 0 : index
    %c0_67 = arith.constant 0 : index
    %c0_68 = arith.constant 0 : index
    %85 = vector.load %arg8[%c0_65, %c0_66, %c0_67, %c0_68] : memref<2x1x8x256xf32, #tpu.memory_space<vmem>>, vector<1x1x8x256xf32>
    %86 = vector.shape_cast %85 : vector<1x1x8x256xf32> to vector<8x256xf32>
    %87 = vector.shape_cast %81 : vector<8x256xf32> to vector<1x1x8x256xf32>
    tpu.vector_store %arg8[%c0_65, %c0_66, %c0_67, %c0_68], %87 {strides = array<i32>} : memref<2x1x8x256xf32, #tpu.memory_space<vmem>>, vector<1x1x8x256xf32>,
    %cst_69 = arith.constant 0.000000e+00 : f32
    %88 = vector.broadcast %cst_69 : f32 to vector<8x256xf32>
    %cst_70 = arith.constant 0.000000e+00 : f32
    %89 = vector.broadcast %cst_70 : f32 to vector<8x256xf32>
    %c1_71 = arith.constant 1 : index
    %c0_72 = arith.constant 0 : index
    %c0_73 = arith.constant 0 : index
    %c0_74 = arith.constant 0 : index
    %90 = vector.load %arg3[%c1_71, %c0_72, %c0_73, %c0_74] : memref<2x1x4x256xf32, #tpu.memory_space<vmem>>, vector<1x1x1x256xf32>
    %91 = vector.shape_cast %90 : vector<1x1x1x256xf32> to vector<1x256xf32>
    %c1_75 = arith.constant 1 : index
    %c0_76 = arith.constant 0 : index
    %c0_77 = arith.constant 0 : index
    %c0_78 = arith.constant 0 : index
    %92 = vector.load %arg4[%c1_75, %c0_76, %c0_77, %c0_78] : memref<2x1x4x256xf32, #tpu.memory_space<vmem>>, vector<1x1x1x256xf32>
    %93 = vector.shape_cast %92 : vector<1x1x1x256xf32> to vector<1x256xf32>
    %c0_79 = arith.constant 0 : index
    %c0_80 = arith.constant 0 : index
    %c0_81 = arith.constant 0 : index
    %c0_82 = arith.constant 0 : index
    %94 = vector.load %arg5[%c0_79, %c0_80, %c0_81, %c0_82] : memref<1x4x8x256xf32, #tpu.memory_space<vmem>>, vector<1x1x8x256xf32>
    %95 = vector.shape_cast %94 : vector<1x1x8x256xf32> to vector<8x256xf32>
    %c0_83 = arith.constant 0 : index
    %c0_84 = arith.constant 0 : index
    %c0_85 = arith.constant 0 : index
    %c0_86 = arith.constant 0 : index
    %96 = vector.load %arg6[%c0_83, %c0_84, %c0_85, %c0_86] : memref<1x4x8x256xf32, #tpu.memory_space<vmem>>, vector<1x1x8x256xf32>
    %97 = vector.shape_cast %96 : vector<1x1x8x256xf32> to vector<8x256xf32>
    %98 = vector.broadcast %91 : vector<1x256xf32> to vector<8x256xf32>
    %99 = arith.mulf %98, %95 : vector<8x256xf32>
    %100 = arith.addf %88, %99 : vector<8x256xf32>
    %101 = vector.broadcast %93 : vector<1x256xf32> to vector<8x256xf32>
    %102 = arith.mulf %101, %97 : vector<8x256xf32>
    %103 = arith.subf %100, %102 : vector<8x256xf32>
    %104 = vector.broadcast %91 : vector<1x256xf32> to vector<8x256xf32>
    %105 = arith.mulf %104, %97 : vector<8x256xf32>
    %106 = arith.addf %89, %105 : vector<8x256xf32>
    %107 = vector.broadcast %93 : vector<1x256xf32> to vector<8x256xf32>
    %108 = arith.mulf %107, %95 : vector<8x256xf32>
    %109 = arith.addf %106, %108 : vector<8x256xf32>
    %c1_87 = arith.constant 1 : index
    %c0_88 = arith.constant 0 : index
    %c1_89 = arith.constant 1 : index
    %c0_90 = arith.constant 0 : index
    %110 = vector.load %arg3[%c1_87, %c0_88, %c1_89, %c0_90] : memref<2x1x4x256xf32, #tpu.memory_space<vmem>>, vector<1x1x1x256xf32>
    %111 = vector.shape_cast %110 : vector<1x1x1x256xf32> to vector<1x256xf32>
    %c1_91 = arith.constant 1 : index
    %c0_92 = arith.constant 0 : index
    %c1_93 = arith.constant 1 : index
    %c0_94 = arith.constant 0 : index
    %112 = vector.load %arg4[%c1_91, %c0_92, %c1_93, %c0_94] : memref<2x1x4x256xf32, #tpu.memory_space<vmem>>, vector<1x1x1x256xf32>
    %113 = vector.shape_cast %112 : vector<1x1x1x256xf32> to vector<1x256xf32>
    %c0_95 = arith.constant 0 : index
    %c1_96 = arith.constant 1 : index
    %c0_97 = arith.constant 0 : index
    %c0_98 = arith.constant 0 : index
    %114 = vector.load %arg5[%c0_95, %c1_96, %c0_97, %c0_98] : memref<1x4x8x256xf32, #tpu.memory_space<vmem>>, vector<1x1x8x256xf32>
    %115 = vector.shape_cast %114 : vector<1x1x8x256xf32> to vector<8x256xf32>
    %c0_99 = arith.constant 0 : index
    %c1_100 = arith.constant 1 : index
    %c0_101 = arith.constant 0 : index
    %c0_102 = arith.constant 0 : index
    %116 = vector.load %arg6[%c0_99, %c1_100, %c0_101, %c0_102] : memref<1x4x8x256xf32, #tpu.memory_space<vmem>>, vector<1x1x8x256xf32>
    %117 = vector.shape_cast %116 : vector<1x1x8x256xf32> to vector<8x256xf32>
    %118 = vector.broadcast %111 : vector<1x256xf32> to vector<8x256xf32>
    %119 = arith.mulf %118, %115 : vector<8x256xf32>
    %120 = arith.addf %103, %119 : vector<8x256xf32>
    %121 = vector.broadcast %113 : vector<1x256xf32> to vector<8x256xf32>
    %122 = arith.mulf %121, %117 : vector<8x256xf32>
    %123 = arith.subf %120, %122 : vector<8x256xf32>
    %124 = vector.broadcast %111 : vector<1x256xf32> to vector<8x256xf32>
    %125 = arith.mulf %124, %117 : vector<8x256xf32>
    %126 = arith.addf %109, %125 : vector<8x256xf32>
    %127 = vector.broadcast %113 : vector<1x256xf32> to vector<8x256xf32>
    %128 = arith.mulf %127, %115 : vector<8x256xf32>
    %129 = arith.addf %126, %128 : vector<8x256xf32>
    %c1_103 = arith.constant 1 : index
    %c0_104 = arith.constant 0 : index
    %c2_105 = arith.constant 2 : index
    %c0_106 = arith.constant 0 : index
    %130 = vector.load %arg3[%c1_103, %c0_104, %c2_105, %c0_106] : memref<2x1x4x256xf32, #tpu.memory_space<vmem>>, vector<1x1x1x256xf32>
    %131 = vector.shape_cast %130 : vector<1x1x1x256xf32> to vector<1x256xf32>
    %c1_107 = arith.constant 1 : index
    %c0_108 = arith.constant 0 : index
    %c2_109 = arith.constant 2 : index
    %c0_110 = arith.constant 0 : index
    %132 = vector.load %arg4[%c1_107, %c0_108, %c2_109, %c0_110] : memref<2x1x4x256xf32, #tpu.memory_space<vmem>>, vector<1x1x1x256xf32>
    %133 = vector.shape_cast %132 : vector<1x1x1x256xf32> to vector<1x256xf32>
    %c0_111 = arith.constant 0 : index
    %c2_112 = arith.constant 2 : index
    %c0_113 = arith.constant 0 : index
    %c0_114 = arith.constant 0 : index
    %134 = vector.load %arg5[%c0_111, %c2_112, %c0_113, %c0_114] : memref<1x4x8x256xf32, #tpu.memory_space<vmem>>, vector<1x1x8x256xf32>
    %135 = vector.shape_cast %134 : vector<1x1x8x256xf32> to vector<8x256xf32>
    %c0_115 = arith.constant 0 : index
    %c2_116 = arith.constant 2 : index
    %c0_117 = arith.constant 0 : index
    %c0_118 = arith.constant 0 : index
    %136 = vector.load %arg6[%c0_115, %c2_116, %c0_117, %c0_118] : memref<1x4x8x256xf32, #tpu.memory_space<vmem>>, vector<1x1x8x256xf32>
    %137 = vector.shape_cast %136 : vector<1x1x8x256xf32> to vector<8x256xf32>
    %138 = vector.broadcast %131 : vector<1x256xf32> to vector<8x256xf32>
    %139 = arith.mulf %138, %135 : vector<8x256xf32>
    %140 = arith.addf %123, %139 : vector<8x256xf32>
    %141 = vector.broadcast %133 : vector<1x256xf32> to vector<8x256xf32>
    %142 = arith.mulf %141, %137 : vector<8x256xf32>
    %143 = arith.subf %140, %142 : vector<8x256xf32>
    %144 = vector.broadcast %131 : vector<1x256xf32> to vector<8x256xf32>
    %145 = arith.mulf %144, %137 : vector<8x256xf32>
    %146 = arith.addf %129, %145 : vector<8x256xf32>
    %147 = vector.broadcast %133 : vector<1x256xf32> to vector<8x256xf32>
    %148 = arith.mulf %147, %135 : vector<8x256xf32>
    %149 = arith.addf %146, %148 : vector<8x256xf32>
    %c1_119 = arith.constant 1 : index
    %c0_120 = arith.constant 0 : index
    %c3_121 = arith.constant 3 : index
    %c0_122 = arith.constant 0 : index
    %150 = vector.load %arg3[%c1_119, %c0_120, %c3_121, %c0_122] : memref<2x1x4x256xf32, #tpu.memory_space<vmem>>, vector<1x1x1x256xf32>
    %151 = vector.shape_cast %150 : vector<1x1x1x256xf32> to vector<1x256xf32>
    %c1_123 = arith.constant 1 : index
    %c0_124 = arith.constant 0 : index
    %c3_125 = arith.constant 3 : index
    %c0_126 = arith.constant 0 : index
    %152 = vector.load %arg4[%c1_123, %c0_124, %c3_125, %c0_126] : memref<2x1x4x256xf32, #tpu.memory_space<vmem>>, vector<1x1x1x256xf32>
    %153 = vector.shape_cast %152 : vector<1x1x1x256xf32> to vector<1x256xf32>
    %c0_127 = arith.constant 0 : index
    %c3_128 = arith.constant 3 : index
    %c0_129 = arith.constant 0 : index
    %c0_130 = arith.constant 0 : index
    %154 = vector.load %arg5[%c0_127, %c3_128, %c0_129, %c0_130] : memref<1x4x8x256xf32, #tpu.memory_space<vmem>>, vector<1x1x8x256xf32>
    %155 = vector.shape_cast %154 : vector<1x1x8x256xf32> to vector<8x256xf32>
    %c0_131 = arith.constant 0 : index
    %c3_132 = arith.constant 3 : index
    %c0_133 = arith.constant 0 : index
    %c0_134 = arith.constant 0 : index
    %156 = vector.load %arg6[%c0_131, %c3_132, %c0_133, %c0_134] : memref<1x4x8x256xf32, #tpu.memory_space<vmem>>, vector<1x1x8x256xf32>
    %157 = vector.shape_cast %156 : vector<1x1x8x256xf32> to vector<8x256xf32>
    %158 = vector.broadcast %151 : vector<1x256xf32> to vector<8x256xf32>
    %159 = arith.mulf %158, %155 : vector<8x256xf32>
    %160 = arith.addf %143, %159 : vector<8x256xf32>
    %161 = vector.broadcast %153 : vector<1x256xf32> to vector<8x256xf32>
    %162 = arith.mulf %161, %157 : vector<8x256xf32>
    %163 = arith.subf %160, %162 : vector<8x256xf32>
    %164 = vector.broadcast %151 : vector<1x256xf32> to vector<8x256xf32>
    %165 = arith.mulf %164, %157 : vector<8x256xf32>
    %166 = arith.addf %149, %165 : vector<8x256xf32>
    %167 = vector.broadcast %153 : vector<1x256xf32> to vector<8x256xf32>
    %168 = arith.mulf %167, %155 : vector<8x256xf32>
    %169 = arith.addf %166, %168 : vector<8x256xf32>
    %c1_135 = arith.constant 1 : index
    %c0_136 = arith.constant 0 : index
    %c0_137 = arith.constant 0 : index
    %c0_138 = arith.constant 0 : index
    %170 = vector.load %arg7[%c1_135, %c0_136, %c0_137, %c0_138] : memref<2x1x8x256xf32, #tpu.memory_space<vmem>>, vector<1x1x8x256xf32>
    %171 = vector.shape_cast %170 : vector<1x1x8x256xf32> to vector<8x256xf32>
    %172 = vector.shape_cast %163 : vector<8x256xf32> to vector<1x1x8x256xf32>
    tpu.vector_store %arg7[%c1_135, %c0_136, %c0_137, %c0_138], %172 {strides = array<i32>} : memref<2x1x8x256xf32, #tpu.memory_space<vmem>>, vector<1x1x8x256xf32>,
    %c1_139 = arith.constant 1 : index
    %c0_140 = arith.constant 0 : index
    %c0_141 = arith.constant 0 : index
    %c0_142 = arith.constant 0 : index
    %173 = vector.load %arg8[%c1_139, %c0_140, %c0_141, %c0_142] : memref<2x1x8x256xf32, #tpu.memory_space<vmem>>, vector<1x1x8x256xf32>
    %174 = vector.shape_cast %173 : vector<1x1x8x256xf32> to vector<8x256xf32>
    %175 = vector.shape_cast %169 : vector<8x256xf32> to vector<1x1x8x256xf32>
    tpu.vector_store %arg8[%c1_139, %c0_140, %c0_141, %c0_142], %175 {strides = array<i32>} : memref<2x1x8x256xf32, #tpu.memory_space<vmem>>, vector<1x1x8x256xf32>,
    return
  }
  func.func @transform_0(%arg0: i32, %arg1: i32, %arg2: i32) -> (i32, i32, i32, i32) {
    %c0_i32 = arith.constant 0 : i32
    %c0_i32_0 = arith.constant 0 : i32
    return %arg2, %arg0, %c0_i32, %arg1 : i32, i32, i32, i32
  }
  func.func @transform_1(%arg0: i32, %arg1: i32, %arg2: i32) -> (i32, i32, i32, i32) {
    %c0_i32 = arith.constant 0 : i32
    %c0_i32_0 = arith.constant 0 : i32
    return %arg2, %arg0, %c0_i32, %arg1 : i32, i32, i32, i32
  }
  func.func @transform_2(%arg0: i32, %arg1: i32, %arg2: i32) -> (i32, i32, i32, i32) {
    %c0_i32 = arith.constant 0 : i32
    %c0_i32_0 = arith.constant 0 : i32
    %c0_i32_1 = arith.constant 0 : i32
    return %arg0, %c0_i32, %c0_i32_0, %arg1 : i32, i32, i32, i32
  }
  func.func @transform_3(%arg0: i32, %arg1: i32, %arg2: i32) -> (i32, i32, i32, i32) {
    %c0_i32 = arith.constant 0 : i32
    %c0_i32_0 = arith.constant 0 : i32
    %c0_i32_1 = arith.constant 0 : i32
    return %arg0, %c0_i32, %c0_i32_0, %arg1 : i32, i32, i32, i32
  }
  func.func @transform_4(%arg0: i32, %arg1: i32, %arg2: i32) -> (i32, i32, i32, i32) {
    %c0_i32 = arith.constant 0 : i32
    %c0_i32_0 = arith.constant 0 : i32
    return %arg2, %arg0, %c0_i32, %arg1 : i32, i32, i32, i32
  }
  func.func @transform_5(%arg0: i32, %arg1: i32, %arg2: i32) -> (i32, i32, i32, i32) {
    %c0_i32 = arith.constant 0 : i32
    %c0_i32_0 = arith.constant 0 : i32
    return %arg2, %arg0, %c0_i32, %arg1 : i32, i32, i32, i32
  }
}

</mosaic_0001>

<llo_original>
// kernel: tpu_custom_call.1
$region0: #{tpu_custom_call.1}
  #allocation0 [shape = 'u32[]', space=smem, size = 0x4, offset = 0x4, fixed_abs, tag = 'smem constant byte address 0x4 - core index']
  #allocation1 [shape = 'u32[72,128]{1,0:T(1,128)}', space=vmem, size = 0x9000, scoped, tag = 'internal scratch']
  %s0 = inlined_call_operand.hbm [shape: f32[2,1,4,256], index: 0, kind: input, shape index: {}]
  %s1 = inlined_call_operand.hbm [shape: f32[2,1,4,256], index: 1, kind: input, shape index: {}]
  %s2 = inlined_call_operand.hbm [shape: f32[1,4,8,256], index: 2, kind: input, shape index: {}]
  %s3 = inlined_call_operand.hbm [shape: f32[1,4,8,256], index: 3, kind: input, shape index: {}]
  %s4 = inlined_call_operand.hbm [shape: f32[2,1,8,256], index: 4, kind: output, shape index: {0}]
  %s5 = inlined_call_operand.hbm [shape: f32[2,1,8,256], index: 5, kind: output, shape index: {1}]
  %6 = xla_tuple %s4, %s5
  %s7 = sld [smem:[#allocation0]]
  $region50: #{tpu_custom_call.1} parent=0
    _
  %s9 = ssub.s32 1, %s7
  %s10 = scalar_select 0, %s9, %s7
  $region1: #{tpu_custom_call.1} parent=0
    #allocation2 [shape = 'u8[8192]{0}', space=vmem, size = 0x2000, scoped, tag = 'input window, operand 0, single buffered']
    #allocation3 [shape = 's32[1]{0}', space=sflag, size = 0x4, scoped, tag = 'scoped memory for tpu_custom_call.1']
    #allocation4 [shape = 's32[1]{0}', space=sflag, size = 0x4, scoped, tag = 'scoped memory for tpu_custom_call.1']
    #allocation5 [shape = 'u8[8192]{0}', space=vmem, size = 0x2000, scoped, tag = 'input window, operand 1, single buffered']
    #allocation6 [shape = 's32[1]{0}', space=sflag, size = 0x4, scoped, tag = 'scoped memory for tpu_custom_call.1']
    #allocation7 [shape = 'u8[32768]{0}', space=vmem, size = 0x8000, scoped, tag = 'input window, operand 2, single buffered']
    #allocation8 [shape = 'u8[32768]{0}', space=vmem, size = 0x8000, scoped, tag = 'input window, operand 3, single buffered']
    #allocation9 [shape = 's32[1]{0}', space=sflag, size = 0x4, scoped, tag = 'scoped memory for tpu_custom_call.1']
    #allocation10 [shape = 'u8[16384]{0}', space=vmem, size = 0x4000, scoped, tag = 'output window, operand 0, single buffered']
    #allocation11 [shape = 'u8[16384]{0}', space=vmem, size = 0x4000, scoped, tag = 'output window, operand 1, single buffered']
    #allocation12 [shape = 's32[1]{0}', space=sflag, size = 0x4, scoped, tag = 'scoped memory for tpu_custom_call.1']
    %11 = vsyncpa [#allocation3], 0
    %12 = vsyncpa [#allocation6], 0
    %13 = vsyncpa [#allocation9], 0
    %14 = vsyncpa [#allocation4], 0
    %15 = vsyncpa [#allocation12], 0
    // Predicated region
    $region2: #{tpu_custom_call.1} parent=1 // pred_check
      _
    $region3: #{tpu_custom_call.1} parent=1 // pred_check_branch
      %17 = sbr.rel (0) target = $region5
    $region4: #{tpu_custom_call.1} parent=1 // pred_region
      %19 = vsyncadd [#allocation3], 0
      %s20 = sshll.u32 %s0, 4
      %s21 = int_to_ptr.hbm [resolvable:$true] %s20
      %s22 = sshll.u32 [#allocation2], 4
      %s23 = int_to_ptr.vmem [resolvable:$true] %s22
      %28 = dma.hbm_to_vmem [thread:$0]  %s21, 256, %s23, [#allocation3], 128, 128, 8
    $region5: #{tpu_custom_call.1} parent=1 // pred_fallthru
      _
    // Predicated region
    $region6: #{tpu_custom_call.1} parent=1 // pred_check
      _
    $region7: #{tpu_custom_call.1} parent=1 // pred_check_branch
      %30 = sbr.rel (0) target = $region9
    $region8: #{tpu_custom_call.1} parent=1 // pred_region
      %32 = vsyncadd [#allocation6], 0
      %s33 = sshll.u32 %s1, 4
      %s34 = int_to_ptr.hbm [resolvable:$true] %s33
      %s35 = sshll.u32 [#allocation5], 4
      %s36 = int_to_ptr.vmem [resolvable:$true] %s35
      %41 = dma.hbm_to_vmem [thread:$0]  %s34, 256, %s36, [#allocation6], 128, 128, 8
    $region9: #{tpu_custom_call.1} parent=1 // pred_fallthru
      _
    // Predicated region
    $region10: #{tpu_custom_call.1} parent=1 // pred_check
      _
    $region11: #{tpu_custom_call.1} parent=1 // pred_check_branch
      %43 = sbr.rel (0) target = $region13
    $region12: #{tpu_custom_call.1} parent=1 // pred_region
      %45 = vsyncadd [#allocation6], 0
      %s46 = sshll.u32 %s2, 4
      %s47 = int_to_ptr.hbm [resolvable:$true] %s46
      %s48 = sshll.u32 [#allocation7], 4
      %s49 = int_to_ptr.vmem [resolvable:$true] %s48
      %54 = dma.hbm_to_vmem [thread:$0]  %s47, 1024, %s49, [#allocation6], 256, 256, 16
    $region13: #{tpu_custom_call.1} parent=1 // pred_fallthru
      _
    // Predicated region
    $region14: #{tpu_custom_call.1} parent=1 // pred_check
      _
    $region15: #{tpu_custom_call.1} parent=1 // pred_check_branch
      %56 = sbr.rel (0) target = $region17
    $region16: #{tpu_custom_call.1} parent=1 // pred_region
      %58 = vsyncadd [#allocation9], 0
      %s59 = sshll.u32 %s3, 4
      %s60 = int_to_ptr.hbm [resolvable:$true] %s59
      %s61 = sshll.u32 [#allocation8], 4
      %s62 = int_to_ptr.vmem [resolvable:$true] %s61
      %67 = dma.hbm_to_vmem [thread:$0]  %s60, 1024, %s62, [#allocation9], 256, 256, 16
    $region17: #{tpu_custom_call.1} parent=1 // pred_fallthru
      _
    // Predicated region
    $region18: #{tpu_custom_call.1} parent=1 // pred_check
      _
    $region19: #{tpu_custom_call.1} parent=1 // pred_check_branch
      %69 = sbr.rel (0) target = $region21
    $region20: #{tpu_custom_call.1} parent=1 // pred_region
      %71 = dma.done [#allocation3], 256
    $region21: #{tpu_custom_call.1} parent=1 // pred_fallthru
      _
    // Predicated region
    $region22: #{tpu_custom_call.1} parent=1 // pred_check
      _
    $region23: #{tpu_custom_call.1} parent=1 // pred_check_branch
      %73 = sbr.rel (0) target = $region25
    $region24: #{tpu_custom_call.1} parent=1 // pred_region
      %75 = dma.done [#allocation6], 256
    $region25: #{tpu_custom_call.1} parent=1 // pred_fallthru
      _
    // Predicated region
    $region26: #{tpu_custom_call.1} parent=1 // pred_check
      _
    $region27: #{tpu_custom_call.1} parent=1 // pred_check_branch
      %77 = sbr.rel (0) target = $region29
    $region28: #{tpu_custom_call.1} parent=1 // pred_region
      %79 = dma.done [#allocation6], 1024
    $region29: #{tpu_custom_call.1} parent=1 // pred_fallthru
      _
    // Predicated region
    $region30: #{tpu_custom_call.1} parent=1 // pred_check
      _
    $region31: #{tpu_custom_call.1} parent=1 // pred_check_branch
      %81 = sbr.rel (0) target = $region33
    $region32: #{tpu_custom_call.1} parent=1 // pred_region
      %83 = dma.done [#allocation9], 1024
    $region33: #{tpu_custom_call.1} parent=1 // pred_fallthru
      _
    %v84 = vld [vmem:[#allocation2] ss:$4 sm:$0x3]
    %v85 = vld [vmem:[#allocation5] ss:$4 sm:$0x3]
    %v86 = vld [vmem:[#allocation7] sm:$0xff]
    %v87 = vld [vmem:[#allocation7 + $0x8] sm:$0xff]
    %v88 = vld [vmem:[#allocation8] sm:$0xff]
    %v89 = vld [vmem:[#allocation8 + $0x8] sm:$0xff]
    %v91 = vperm.slane %v84, 0
    %v92 = vperm.slane %v84, 1
    %v95 = vmul.f32 %v91, %v86
    %v96 = vmul.f32 %v92, %v87
    %v97 = vadd.f32 %v95, 0.0
    %v98 = vadd.f32 %v96, 0.0
    %v100 = vperm.slane %v85, 0
    %v101 = vperm.slane %v85, 1
    %v104 = vmul.f32 %v100, %v88
    %v105 = vmul.f32 %v101, %v89
    %v106 = vsub.f32 %v97, %v104
    %v107 = vsub.f32 %v98, %v105
    %v108 = vmul.f32 %v91, %v88
    %v109 = vmul.f32 %v92, %v89
    %v110 = vadd.f32 %v108, 0.0
    %v111 = vadd.f32 %v109, 0.0
    %v112 = vmul.f32 %v100, %v86
    %v113 = vmul.f32 %v101, %v87
    %v114 = vadd.f32 %v110, %v112
    %v115 = vadd.f32 %v111, %v113
    %s116 = scalar_lea.vmem [#allocation2], 1
    %v117 = vld [vmem:[%s116] ss:$4 sm:$0x3]
    %s118 = scalar_lea.vmem [#allocation5], 1
    %v119 = vld [vmem:[%s118] ss:$4 sm:$0x3]
    %s120 = scalar_lea.vmem [#allocation7], 16
    %v121 = vld [vmem:[%s120] sm:$0xff]
    %v122 = vld [vmem:[%s120 + $0x8] sm:$0xff]
    %s123 = scalar_lea.vmem [#allocation8], 16
    %v124 = vld [vmem:[%s123] sm:$0xff]
    %v125 = vld [vmem:[%s123 + $0x8] sm:$0xff]
    %v127 = vperm.slane %v117, 0
    %v128 = vperm.slane %v117, 1
    %v131 = vmul.f32 %v127, %v121
    %v132 = vmul.f32 %v128, %v122
    %v133 = vadd.f32 %v106, %v131
    %v134 = vadd.f32 %v107, %v132
    %v136 = vperm.slane %v119, 0
    %v137 = vperm.slane %v119, 1
    %v140 = vmul.f32 %v136, %v124
    %v141 = vmul.f32 %v137, %v125
    %v142 = vsub.f32 %v133, %v140
    %v143 = vsub.f32 %v134, %v141
    %v144 = vmul.f32 %v127, %v124
    %v145 = vmul.f32 %v128, %v125
    %v146 = vadd.f32 %v114, %v144
    %v147 = vadd.f32 %v115, %v145
    %v148 = vmul.f32 %v136, %v121
    %v149 = vmul.f32 %v137, %v122
    %v150 = vadd.f32 %v146, %v148
    %v151 = vadd.f32 %v147, %v149
    %s152 = scalar_lea.vmem [#allocation2], 2
    %v153 = vld [vmem:[%s152] ss:$4 sm:$0x3]
    %s154 = scalar_lea.vmem [#allocation5], 2
    %v155 = vld [vmem:[%s154] ss:$4 sm:$0x3]
    %s156 = scalar_lea.vmem [#allocation7], 32
    %v157 = vld [vmem:[%s156] sm:$0xff]
    %v158 = vld [vmem:[%s156 + $0x8] sm:$0xff]
    %s159 = scalar_lea.vmem [#allocation8], 32
    %v160 = vld [vmem:[%s159] sm:$0xff]
    %v161 = vld [vmem:[%s159 + $0x8] sm:$0xff]
    %v163 = vperm.slane %v153, 0
    %v164 = vperm.slane %v153, 1
    %v167 = vmul.f32 %v163, %v157
    %v168 = vmul.f32 %v164, %v158
    %v169 = vadd.f32 %v142, %v167
    %v170 = vadd.f32 %v143, %v168
    %v172 = vperm.slane %v155, 0
    %v173 = vperm.slane %v155, 1
    %v176 = vmul.f32 %v172, %v160
    %v177 = vmul.f32 %v173, %v161
    %v178 = vsub.f32 %v169, %v176
    %v179 = vsub.f32 %v170, %v177
    %v180 = vmul.f32 %v163, %v160
    %v181 = vmul.f32 %v164, %v161
    %v182 = vadd.f32 %v150, %v180
    %v183 = vadd.f32 %v151, %v181
    %v184 = vmul.f32 %v172, %v157
    %v185 = vmul.f32 %v173, %v158
    %v186 = vadd.f32 %v182, %v184
    %v187 = vadd.f32 %v183, %v185
    %s188 = scalar_lea.vmem [#allocation2], 3
    %v189 = vld [vmem:[%s188] ss:$4 sm:$0x3]
    %s190 = scalar_lea.vmem [#allocation5], 3
    %v191 = vld [vmem:[%s190] ss:$4 sm:$0x3]
    %s192 = scalar_lea.vmem [#allocation7], 48
    %v193 = vld [vmem:[%s192] sm:$0xff]
    %v194 = vld [vmem:[%s192 + $0x8] sm:$0xff]
    %s195 = scalar_lea.vmem [#allocation8], 48
    %v196 = vld [vmem:[%s195] sm:$0xff]
    %v197 = vld [vmem:[%s195 + $0x8] sm:$0xff]
    %v199 = vperm.slane %v189, 0
    %v200 = vperm.slane %v189, 1
    %v203 = vmul.f32 %v199, %v193
    %v204 = vmul.f32 %v200, %v194
    %v205 = vadd.f32 %v178, %v203
    %v206 = vadd.f32 %v179, %v204
    %v208 = vperm.slane %v191, 0
    %v209 = vperm.slane %v191, 1
    %v212 = vmul.f32 %v208, %v196
    %v213 = vmul.f32 %v209, %v197
    %v214 = vsub.f32 %v205, %v212
    %v215 = vsub.f32 %v206, %v213
    %v216 = vmul.f32 %v199, %v196
    %v217 = vmul.f32 %v200, %v197
    %v218 = vadd.f32 %v186, %v216
    %v219 = vadd.f32 %v187, %v217
    %v220 = vmul.f32 %v208, %v193
    %v221 = vmul.f32 %v209, %v194
    %v222 = vadd.f32 %v218, %v220
    %v223 = vadd.f32 %v219, %v221
    %224 = vst [vmem:[#allocation10] sm:$0xff] %v214
    %225 = vst [vmem:[#allocation10 + $0x8] sm:$0xff] %v215
    %226 = vst [vmem:[#allocation11] sm:$0xff] %v222
    %227 = vst [vmem:[#allocation11 + $0x8] sm:$0xff] %v223
    %s228 = scalar_lea.vmem [#allocation2], 8
    %v229 = vld [vmem:[%s228] ss:$4 sm:$0x3]
    %s230 = scalar_lea.vmem [#allocation5], 8
    %v231 = vld [vmem:[%s230] ss:$4 sm:$0x3]
    %v232 = vld [vmem:[#allocation7] sm:$0xff]
    %v233 = vld [vmem:[#allocation7 + $0x8] sm:$0xff]
    %v234 = vld [vmem:[#allocation8] sm:$0xff]
    %v235 = vld [vmem:[#allocation8 + $0x8] sm:$0xff]
    %v237 = vperm.slane %v229, 0
    %v238 = vperm.slane %v229, 1
    %v241 = vmul.f32 %v237, %v232
    %v242 = vmul.f32 %v238, %v233
    %v243 = vadd.f32 %v241, 0.0
    %v244 = vadd.f32 %v242, 0.0
    %v246 = vperm.slane %v231, 0
    %v247 = vperm.slane %v231, 1
    %v250 = vmul.f32 %v246, %v234
    %v251 = vmul.f32 %v247, %v235
    %v252 = vsub.f32 %v243, %v250
    %v253 = vsub.f32 %v244, %v251
    %v254 = vmul.f32 %v237, %v234
    %v255 = vmul.f32 %v238, %v235
    %v256 = vadd.f32 %v254, 0.0
    %v257 = vadd.f32 %v255, 0.0
    %v258 = vmul.f32 %v246, %v232
    %v259 = vmul.f32 %v247, %v233
    %v260 = vadd.f32 %v256, %v258
    %v261 = vadd.f32 %v257, %v259
    %s262 = scalar_lea.vmem %s228, 1 [#allocation2]
    %v263 = vld [vmem:[%s262] ss:$4 sm:$0x3]
    %s264 = scalar_lea.vmem %s230, 1 [#allocation5]
    %v265 = vld [vmem:[%s264] ss:$4 sm:$0x3]
    %v266 = vld [vmem:[%s120] sm:$0xff]
    %v267 = vld [vmem:[%s120 + $0x8] sm:$0xff]
    %v268 = vld [vmem:[%s123] sm:$0xff]
    %v269 = vld [vmem:[%s123 + $0x8] sm:$0xff]
    %v271 = vperm.slane %v263, 0
    %v272 = vperm.slane %v263, 1
    %v275 = vmul.f32 %v271, %v266
    %v276 = vmul.f32 %v272, %v267
    %v277 = vadd.f32 %v252, %v275
    %v278 = vadd.f32 %v253, %v276
    %v280 = vperm.slane %v265, 0
    %v281 = vperm.slane %v265, 1
    %v284 = vmul.f32 %v280, %v268
    %v285 = vmul.f32 %v281, %v269
    %v286 = vsub.f32 %v277, %v284
    %v287 = vsub.f32 %v278, %v285
    %v288 = vmul.f32 %v271, %v268
    %v289 = vmul.f32 %v272, %v269
    %v290 = vadd.f32 %v260, %v288
    %v291 = vadd.f32 %v261, %v289
    %v292 = vmul.f32 %v280, %v266
    %v293 = vmul.f32 %v281, %v267
    %v294 = vadd.f32 %v290, %v292
    %v295 = vadd.f32 %v291, %v293
    %s296 = scalar_lea.vmem %s228, 2 [#allocation2]
    %v297 = vld [vmem:[%s296] ss:$4 sm:$0x3]
    %s298 = scalar_lea.vmem %s230, 2 [#allocation5]
    %v299 = vld [vmem:[%s298] ss:$4 sm:$0x3]
    %v300 = vld [vmem:[%s156] sm:$0xff]
    %v301 = vld [vmem:[%s156 + $0x8] sm:$0xff]
    %v302 = vld [vmem:[%s159] sm:$0xff]
    %v303 = vld [vmem:[%s159 + $0x8] sm:$0xff]
    %v305 = vperm.slane %v297, 0
    %v306 = vperm.slane %v297, 1
    %v309 = vmul.f32 %v305, %v300
    %v310 = vmul.f32 %v306, %v301
    %v311 = vadd.f32 %v286, %v309
    %v312 = vadd.f32 %v287, %v310
    %v314 = vperm.slane %v299, 0
    %v315 = vperm.slane %v299, 1
    %v318 = vmul.f32 %v314, %v302
    %v319 = vmul.f32 %v315, %v303
    %v320 = vsub.f32 %v311, %v318
    %v321 = vsub.f32 %v312, %v319
    %v322 = vmul.f32 %v305, %v302
    %v323 = vmul.f32 %v306, %v303
    %v324 = vadd.f32 %v294, %v322
    %v325 = vadd.f32 %v295, %v323
    %v326 = vmul.f32 %v314, %v300
    %v327 = vmul.f32 %v315, %v301
    %v328 = vadd.f32 %v324, %v326
    %v329 = vadd.f32 %v325, %v327
    %s330 = scalar_lea.vmem %s228, 3 [#allocation2]
    %v331 = vld [vmem:[%s330] ss:$4 sm:$0x3]
    %s332 = scalar_lea.vmem %s230, 3 [#allocation5]
    %v333 = vld [vmem:[%s332] ss:$4 sm:$0x3]
    %v334 = vld [vmem:[%s192] sm:$0xff]
    %v335 = vld [vmem:[%s192 + $0x8] sm:$0xff]
    %v336 = vld [vmem:[%s195] sm:$0xff]
    %v337 = vld [vmem:[%s195 + $0x8] sm:$0xff]
    %v339 = vperm.slane %v331, 0
    %v340 = vperm.slane %v331, 1
    %v343 = vmul.f32 %v339, %v334
    %v344 = vmul.f32 %v340, %v335
    %v345 = vadd.f32 %v320, %v343
    %v346 = vadd.f32 %v321, %v344
    %v348 = vperm.slane %v333, 0
    %v349 = vperm.slane %v333, 1
    %v352 = vmul.f32 %v348, %v336
    %v353 = vmul.f32 %v349, %v337
    %v354 = vsub.f32 %v345, %v352
    %v355 = vsub.f32 %v346, %v353
    %v356 = vmul.f32 %v339, %v336
    %v357 = vmul.f32 %v340, %v337
    %v358 = vadd.f32 %v328, %v356
    %v359 = vadd.f32 %v329, %v357
    %v360 = vmul.f32 %v348, %v334
    %v361 = vmul.f32 %v349, %v335
    %v362 = vadd.f32 %v358, %v360
    %v363 = vadd.f32 %v359, %v361
    %s364 = scalar_lea.vmem [#allocation10], 16
    %365 = vst [vmem:[%s364] sm:$0xff] %v354
    %366 = vst [vmem:[%s364 + $0x8] sm:$0xff] %v355
    %s367 = scalar_lea.vmem [#allocation11], 16
    %368 = vst [vmem:[%s367] sm:$0xff] %v362
    %369 = vst [vmem:[%s367 + $0x8] sm:$0xff] %v363
    // Predicated region
    $region34: #{tpu_custom_call.1} parent=1 // pred_check
      _
    $region35: #{tpu_custom_call.1} parent=1 // pred_check_branch
      %371 = sbr.rel (0) target = $region37
    $region36: #{tpu_custom_call.1} parent=1 // pred_region
      %373 = vsyncadd [#allocation4], 0
      %s374 = sshll.u32 [#allocation10], 4
      %s375 = int_to_ptr.vmem [resolvable:$true] %s374
      %s376 = sshll.u32 %s4, 4
      %s377 = int_to_ptr.hbm [resolvable:$true] %s376
      %382 = dma.vmem_to_hbm [thread:$0]  %s375, 512, %s377, [#allocation4], 256, 256, 16
    $region37: #{tpu_custom_call.1} parent=1 // pred_fallthru
      _
    // Predicated region
    $region38: #{tpu_custom_call.1} parent=1 // pred_check
      _
    $region39: #{tpu_custom_call.1} parent=1 // pred_check_branch
      %384 = sbr.rel (0) target = $region41
    $region40: #{tpu_custom_call.1} parent=1 // pred_region
      %386 = vsyncadd [#allocation12], 0
      %s387 = sshll.u32 [#allocation11], 4
      %s388 = int_to_ptr.vmem [resolvable:$true] %s387
      %s389 = sshll.u32 %s5, 4
      %s390 = int_to_ptr.hbm [resolvable:$true] %s389
      %395 = dma.vmem_to_hbm [thread:$0]  %s388, 512, %s390, [#allocation12], 256, 256, 16
    $region41: #{tpu_custom_call.1} parent=1 // pred_fallthru
      _
    // Predicated region
    $region42: #{tpu_custom_call.1} parent=1 // pred_check
      _
    $region43: #{tpu_custom_call.1} parent=1 // pred_check_branch
      %397 = sbr.rel (0) target = $region45
    $region44: #{tpu_custom_call.1} parent=1 // pred_region
      %399 = dma.done [#allocation4], 512
    $region45: #{tpu_custom_call.1} parent=1 // pred_fallthru
      _
    // Predicated region
    $region46: #{tpu_custom_call.1} parent=1 // pred_check
      _
    $region47: #{tpu_custom_call.1} parent=1 // pred_check_branch
      %401 = sbr.rel (0) target = $region49
    $region48: #{tpu_custom_call.1} parent=1 // pred_region
      %403 = dma.done [#allocation12], 512
    $region49: #{tpu_custom_call.1} parent=1 // pred_fallthru
      _
    %404 = vsyncpa [#allocation3], 1
    %405 = vsyncpa [#allocation6], 1
    %406 = vsyncpa [#allocation9], 1
    %407 = vsyncpa [#allocation4], 1
    %408 = vsyncpa [#allocation12], 1

</llo_original>
